<compile_context>
chip_gen: v7x
topology: tpu7x:2x2x1
jax: 0.10.0
libtpu: 0.0.40
codegen_flags: <defaults>
</compile_context>

<pallas_src>
import jax
import jax.numpy as jnp
from jax.experimental import pallas as pl
from jax.experimental.pallas import tpu as pltpu

NUM_LABELS = 47
LANE = 128            # label axis padded to one full lane width
MAX_ROW_TILE = 1024   # rows per grid step upper bound (multiple of 16)
VMEM_BUDGET = 24 * 1024 * 1024  # conservative per-kernel VMEM budget (v7x-safe)
BF16 = jnp.bfloat16


def _round_up(x, m):
    return ((x + m - 1) // m) * m


# ----------------------------------------------------------------------------
# Pallas kernel: fused bf16 projection + softmax / alpha-blend / softmax
# ----------------------------------------------------------------------------
def _kingbert_fused_kernel(hd_ref, ha_ref, wd_ref, wa_ref,
                           alpha_ref, bias_ref, mask_ref, out_ref):
    """One row-tile of the KingBert ensemble.

    hd_ref, ha_ref : [TM, Hp]   bf16 hidden states (distilbert / albert stand-ins)
    wd_ref, wa_ref : [Hp, 128]  bf16 projection weights, label axis zero-padded 47->128
    alpha_ref      : [1, 128]   f32 alpha, zero-padded 47->128
    bias_ref       : [1, 128]   f32 additive lane bias: 0 valid, -1e30 pad
    mask_ref       : [1, 128]   f32 lane mask: 1 valid, 0 pad
    out_ref        : [TM, 128]  f32 final probabilities (padded lanes are exactly 0)
    """
    hd = hd_ref[...]
    ha = ha_ref[...]
    wd = wd_ref[...]
    wa = wa_ref[...]
    alpha = alpha_ref[...]        # [1,128] broadcasts over rows
    bias = bias_ref[...]
    mask = mask_ref[...]

    # Fused hidden -> label projection: bf16 MXU matmul, f32 accumulation.
    # Padded label lanes (zero weight columns) get a -1e30 additive bias ->
    # zero probability after softmax; no per-tile iota/compare/select needed.
    d_logits = jnp.dot(hd, wd, preferred_element_type=jnp.float32) + bias
    a_logits = jnp.dot(ha, wa, preferred_element_type=jnp.float32) + bias

    def softmax_rows(x):
        m = jnp.max(x, axis=1, keepdims=True)
        e = jnp.exp(x - m)                      # pad lanes underflow to exactly 0
        return e * pl.reciprocal(jnp.sum(e, axis=1, keepdims=True), approx=False)

    d_sm = softmax_rows(d_logits)
    a_sm = softmax_rows(a_logits)

    # Blend: a + alpha * (d - a)  ==  d*alpha + a*(1-alpha).  Padded lanes stay 0.
    blended = a_sm + alpha * (d_sm - a_sm)

    # Final softmax.  Max-subtraction kept so the kernel is safe for any alpha
    # (blended leaves [0,1] if alpha is trained outside [0,1]); padded lanes
    # are zeroed with the precomputed 0/1 mask so they carry no probability.
    m = jnp.max(blended, axis=1, keepdims=True)
    e = jnp.exp(blended - m) * mask
    out_ref[...] = e * pl.reciprocal(jnp.sum(e, axis=1, keepdims=True), approx=False)


# ----------------------------------------------------------------------------
# Wrapper: minimal padding, ragged row tiling, pallas_call
# ----------------------------------------------------------------------------
def _pad_axis(x, axis, target):
    cur = x.shape[axis]
    if cur == target:
        return x
    widths = [(0, 0)] * x.ndim
    widths[axis] = (0, target - cur)
    return jnp.pad(x, widths)


@jax.jit
def kingbert_ensemble_fused(h_d, h_a, w_d, w_a, alpha):
    """h_d, h_a: [N, H] hidden states; w_d, w_a: [H, 47]; alpha: [47] -> [N, 47]."""
    n, hdim = h_d.shape
    assert h_a.shape == (n, hdim)
    assert w_d.shape == (hdim, NUM_LABELS) and w_a.shape == (hdim, NUM_LABELS)

    # Contraction dim padded to a lane multiple (zeros -> no semantic change);
    # no-op for the common H=768/1024 backbone hidden sizes.
    hdim_p = _round_up(hdim, LANE)
    # Rows padded only to a bf16-sublane multiple — NOT to a multiple of TM, so
    # no full-tensor HBM copy and no up-to-(TM-1) rows of dead DMA/compute.
    n_p = _round_up(n, 16)

    # Row tile: multiple of 16; aim for >= 2 tiles so v7x's two TensorCores
    # both get work; cap at 1024; clamp against a VMEM budget (v7x has 64 MiB).
    if n_p <= 16:
        tm = 16
    else:
        tm = min(MAX_ROW_TILE, _round_up(pl.cdiv(n_p, 2), 16))
    per_row_bytes = (2 * 2 * hdim_p * 2) + (2 * LANE * 4) + (6 * LANE * 4)
    tm = min(tm, max(16, (VMEM_BUDGET // per_row_bytes) // 16 * 16))

    grid_m = pl.cdiv(n_p, tm)          # ragged last tile allowed
    out_rows = grid_m * tm             # output allocated tile-aligned (no input pad)

    def prep_h(h):
        h = h if h.dtype == BF16 else h.astype(BF16)   # bf16 HBM->VMEM DMA + MXU
        h = _pad_axis(h, 0, n_p)
        return _pad_axis(h, 1, hdim_p)

    def prep_w(w):
        w = w if w.dtype == BF16 else w.astype(BF16)
        w = _pad_axis(w, 0, hdim_p)
        return _pad_axis(w, 1, LANE)   # label axis zero-padded 47 -> 128 (lane-dense)

    h_d_p, h_a_p = prep_h(h_d), prep_h(h_a)
    w_d_p, w_a_p = prep_w(w_d), prep_w(w_a)

    lane_idx = jnp.arange(LANE)
    valid = (lane_idx < NUM_LABELS)
    alpha_p = jnp.zeros((1, LANE), jnp.float32).at[0, :NUM_LABELS].set(
        alpha.astype(jnp.float32))
    lane_bias = jnp.where(valid, 0.0, -1e30).astype(jnp.float32)[None, :]
    lane_mask = valid.astype(jnp.float32)[None, :]

    out = pl.pallas_call(
        _kingbert_fused_kernel,
        out_shape=jax.ShapeDtypeStruct((out_rows, LANE), jnp.float32),
        grid=(grid_m,),
        in_specs=[
            pl.BlockSpec((tm, hdim_p), lambda i: (i, 0)),
            pl.BlockSpec((tm, hdim_p), lambda i: (i, 0)),
            pl.BlockSpec((hdim_p, LANE), lambda i: (0, 0)),
            pl.BlockSpec((hdim_p, LANE), lambda i: (0, 0)),
            pl.BlockSpec((1, LANE), lambda i: (0, 0)),
            pl.BlockSpec((1, LANE), lambda i: (0, 0)),
            pl.BlockSpec((1, LANE), lambda i: (0, 0)),
        ],
        out_specs=pl.BlockSpec((tm, LANE), lambda i: (i, 0)),
        compiler_params=pltpu.CompilerParams(
            # Row tiles are independent -> pipeline and shard across v7x's two
            # TensorCores (no effect on v5e/v6e's single TC).
            dimension_semantics=("parallel",),
        ),
    )(h_d_p, h_a_p, w_d_p, w_a_p, alpha_p, lane_bias, lane_mask)

    # Slice off padded rows and padded label lanes.  (Downstream consumers that
    # tolerate a [N, 128] padded-lane layout can take out[:n] instead.)
    return out[:n, :NUM_LABELS]


# ----------------------------------------------------------------------------
# Deterministic stand-ins for the frozen backbones (plain-JAX glue)
# ----------------------------------------------------------------------------
def make_standin_backbone(key, vocab_size, hidden):
    """Tiny frozen token-classification backbone: embedding -> bf16 hidden states.

    Hidden states are emitted directly in bf16 so the Pallas wrapper performs no
    dtype-cast HBM copy.  The hidden->47 projection weight is exposed separately
    so it can be fused into the kernel; `apply` keeps the unfused logits path
    (in f32, from the same bf16-rounded values) for the correctness reference.
    """
    k_emb, k_w = jax.random.split(key)
    emb = (jax.random.normal(k_emb, (vocab_size, hidden), dtype=jnp.float32) * 0.1
           ).astype(BF16)
    w = (jax.random.normal(k_w, (hidden, NUM_LABELS), dtype=jnp.float32) * 0.1
         ).astype(BF16)

    def hidden_states(input_ids, attention_mask):
        h = emb[input_ids]                                       # [1, seq, hidden] bf16
        return h * attention_mask[..., None].astype(BF16)

    def apply(input_ids, attention_mask):
        h = hidden_states(input_ids, attention_mask).astype(jnp.float32)
        logits = jnp.einsum("bsh,hc->bsc", h, w.astype(jnp.float32),
                            precision=jax.lax.Precision.HIGHEST)
        return {"logits": logits}                                # [1, seq, 47]

    return {"hidden": hidden_states, "apply": apply, "proj_w": w}


def ensembler(distil_feats, albert_feats, distil_word_ids, albert_word_ids):
    # TODO(synk): the real `ensembler` (wordpiece -> word alignment) is external
    # and undefined in the reference; identity alignment used here.
    del distil_word_ids, albert_word_ids
    return distil_feats, albert_feats


# ----------------------------------------------------------------------------
# Full KingBert forward
# ----------------------------------------------------------------------------
def kingbert_forward(params, distil, albert,
                     distilbert_input_ids, albert_input_ids,
                     distil_attention_mask, alb_attention_mask,
                     distilbert_word_ids, albert_word_ids):
    # Frozen backbones produce per-token bf16 hidden states; the hidden->47
    # projection + softmax/blend/softmax all run fused inside the Pallas kernel.
    h_d = jnp.squeeze(distil["hidden"](distilbert_input_ids, distil_attention_mask), axis=0)
    h_a = jnp.squeeze(albert["hidden"](albert_input_ids, alb_attention_mask), axis=0)

    h_d_fixed, h_a_fixed = ensembler(
        h_d, h_a,
        jnp.squeeze(distilbert_word_ids), jnp.squeeze(albert_word_ids))

    return kingbert_ensemble_fused(
        h_d_fixed, h_a_fixed, distil["proj_w"], albert["proj_w"], params["alpha"])


# ----------------------------------------------------------------------------
# Reference (plain-JAX) implementation for a correctness check
# ----------------------------------------------------------------------------
def _ref_ensemble(d_logits, a_logits, alpha):
    ds = jax.nn.softmax(d_logits, axis=1)
    asm = jax.nn.softmax(a_logits, axis=1)
    blended = ds * alpha[None, :] + asm * (1.0 - alpha[None, :])
    return jax.nn.softmax(blended, axis=1)


if __name__ == "__main__":
    key = jax.random.PRNGKey(0)
    k_d, k_a, k_ids_d, k_ids_a = jax.random.split(key, 4)

    seq = 8
    vocab = 64
    hidden = 32

    # KingBert's own parameter: alpha = 0.5 * ones(47)
    params = {"alpha": 0.5 * jnp.ones((NUM_LABELS,), dtype=jnp.float32)}

    # Frozen stand-in backbones with deterministic weights
    distil = make_standin_backbone(k_d, vocab, hidden)
    albert = make_standin_backbone(k_a, vocab, hidden)

    distilbert_input_ids = jax.random.randint(k_ids_d, (1, seq), 0, vocab, dtype=jnp.int32)
    albert_input_ids = jax.random.randint(k_ids_a, (1, seq), 0, vocab, dtype=jnp.int32)
    distil_attention_mask = jnp.ones((1, seq), dtype=jnp.int32)
    alb_attention_mask = jnp.ones((1, seq), dtype=jnp.int32)
    distilbert_word_ids = jnp.arange(seq, dtype=jnp.int32)[None, :]
    albert_word_ids = jnp.arange(seq, dtype=jnp.int32)[None, :]

    out = kingbert_forward(
        params, distil, albert,
        distilbert_input_ids, albert_input_ids,
        distil_attention_mask, alb_attention_mask,
        distilbert_word_ids, albert_word_ids,
    )
    out = jax.block_until_ready(out)

    # Verify against the pure-JAX (unfused) reference computed from the same
    # bf16-rounded hidden states / weights (f32 accumulation in both paths).
    d_logits = jnp.squeeze(distil["apply"](distilbert_input_ids, distil_attention_mask)["logits"], axis=0)
    a_logits = jnp.squeeze(albert["apply"](albert_input_ids, alb_attention_mask)["logits"], axis=0)
    ref = _ref_ensemble(d_logits, a_logits, params["alpha"])

    assert out.shape == (seq, NUM_LABELS)
    assert jnp.allclose(out, ref, atol=1e-4, rtol=1e-4), "mismatch vs reference"
    # Rows of the final softmax must sum to 1 (exact reciprocal used to normalize).
    assert jnp.allclose(jnp.sum(out, axis=1), 1.0, atol=1e-5)

    print("KERNEL_OK")
</pallas_src>

<mosaic_0001>
module attributes {stable_mosaic.version = 11 : i64} {
  func.func @_kingbert_fused_kernel(%arg0: i32, %arg1: memref<16x128xbf16, #tpu.memory_space<vmem>>, %arg2: memref<16x128xbf16, #tpu.memory_space<vmem>>, %arg3: memref<128x128xbf16, #tpu.memory_space<vmem>>, %arg4: memref<128x128xbf16, #tpu.memory_space<vmem>>, %arg5: memref<1x128xf32, #tpu.memory_space<vmem>>, %arg6: memref<1x128xf32, #tpu.memory_space<vmem>>, %arg7: memref<1x128xf32, #tpu.memory_space<vmem>>, %arg8: memref<16x128xf32, #tpu.memory_space<vmem>>) attributes {dimension_semantics = [#tpu.dimension_semantics<parallel>], iteration_bounds = array<i64: 1>, scalar_prefetch = 0 : i64, scratch_operands = 0 : i64, tpu.core_type = #tpu.core_type<tc>, window_params = [{transform_indices = @transform_0, window_bounds = array<i64: 16, 128>}, {transform_indices = @transform_1, window_bounds = array<i64: 16, 128>}, {pipeline_mode = #tpu.pipeline_mode<synchronous>, transform_indices = @transform_2, window_bounds = array<i64: 128, 128>}, {pipeline_mode = #tpu.pipeline_mode<synchronous>, transform_indices = @transform_3, window_bounds = array<i64: 128, 128>}, {pipeline_mode = #tpu.pipeline_mode<synchronous>, transform_indices = @transform_4, window_bounds = array<i64: 1, 128>}, {pipeline_mode = #tpu.pipeline_mode<synchronous>, transform_indices = @transform_5, window_bounds = array<i64: 1, 128>}, {pipeline_mode = #tpu.pipeline_mode<synchronous>, transform_indices = @transform_6, window_bounds = array<i64: 1, 128>}, {transform_indices = @transform_7, window_bounds = array<i64: 16, 128>}]} {
    %c0 = arith.constant 0 : index
    %c0_0 = arith.constant 0 : index
    %0 = vector.load %arg1[%c0, %c0_0] : memref<16x128xbf16, #tpu.memory_space<vmem>>, vector<16x128xbf16>
    %c0_1 = arith.constant 0 : index
    %c0_2 = arith.constant 0 : index
    %1 = vector.load %arg2[%c0_1, %c0_2] : memref<16x128xbf16, #tpu.memory_space<vmem>>, vector<16x128xbf16>
    %c0_3 = arith.constant 0 : index
    %c0_4 = arith.constant 0 : index
    %2 = vector.load %arg3[%c0_3, %c0_4] : memref<128x128xbf16, #tpu.memory_space<vmem>>, vector<128x128xbf16>
    %c0_5 = arith.constant 0 : index
    %c0_6 = arith.constant 0 : index
    %3 = vector.load %arg4[%c0_5, %c0_6] : memref<128x128xbf16, #tpu.memory_space<vmem>>, vector<128x128xbf16>
    %c0_7 = arith.constant 0 : index
    %c0_8 = arith.constant 0 : index
    %4 = vector.load %arg5[%c0_7, %c0_8] : memref<1x128xf32, #tpu.memory_space<vmem>>, vector<1x128xf32>
    %c0_9 = arith.constant 0 : index
    %c0_10 = arith.constant 0 : index
    %5 = vector.load %arg6[%c0_9, %c0_10] : memref<1x128xf32, #tpu.memory_space<vmem>>, vector<1x128xf32>
    %c0_11 = arith.constant 0 : index
    %c0_12 = arith.constant 0 : index
    %6 = vector.load %arg7[%c0_11, %c0_12] : memref<1x128xf32, #tpu.memory_space<vmem>>, vector<1x128xf32>
    %cst = arith.constant dense<0.000000e+00> : vector<16x128xf32>
    %7 = tpu.matmul %0, %2, %cst {dimension_numbers = #tpu.dot_dimension_numbers<[1], [0], [0], [1], [0, 0, 1, 1], [], []>} : vector<16x128xbf16>, vector<128x128xbf16>, vector<16x128xf32> -> vector<16x128xf32>
    %8 = vector.broadcast %5 : vector<1x128xf32> to vector<16x128xf32>
    %9 = arith.addf %7, %8 : vector<16x128xf32>
    %cst_13 = arith.constant dense<0.000000e+00> : vector<16x128xf32>
    %10 = tpu.matmul %1, %3, %cst_13 {dimension_numbers = #tpu.dot_dimension_numbers<[1], [0], [0], [1], [0, 0, 1, 1], [], []>} : vector<16x128xbf16>, vector<128x128xbf16>, vector<16x128xf32> -> vector<16x128xf32>
    %11 = vector.broadcast %5 : vector<1x128xf32> to vector<16x128xf32>
    %12 = arith.addf %10, %11 : vector<16x128xf32>
    %cst_14 = arith.constant dense<0xFF800000> : vector<16xf32>
    %13 = vector.multi_reduction <maximumf>, %9, %cst_14 [1] : vector<16x128xf32> to vector<16xf32>
    %14 = vector.shape_cast %13 : vector<16xf32> to vector<16x1xf32>
    %15 = vector.broadcast %14 : vector<16x1xf32> to vector<16x128xf32>
    %16 = arith.subf %9, %15 : vector<16x128xf32>
    %17 = math.exp %16 : vector<16x128xf32>
    %cst_15 = arith.constant dense<0.000000e+00> : vector<16xf32>
    %18 = vector.multi_reduction <add>, %17, %cst_15 [1] : vector<16x128xf32> to vector<16xf32>
    %19 = vector.shape_cast %18 : vector<16xf32> to vector<16x1xf32>
    %20 = tpu.reciprocal %19 : vector<16x1xf32> -> vector<16x1xf32>
    %21 = vector.broadcast %20 : vector<16x1xf32> to vector<16x128xf32>
    %22 = arith.mulf %17, %21 : vector<16x128xf32>
    %cst_16 = arith.constant dense<0xFF800000> : vector<16xf32>
    %23 = vector.multi_reduction <maximumf>, %12, %cst_16 [1] : vector<16x128xf32> to vector<16xf32>
    %24 = vector.shape_cast %23 : vector<16xf32> to vector<16x1xf32>
    %25 = vector.broadcast %24 : vector<16x1xf32> to vector<16x128xf32>
    %26 = arith.subf %12, %25 : vector<16x128xf32>
    %27 = math.exp %26 : vector<16x128xf32>
    %cst_17 = arith.constant dense<0.000000e+00> : vector<16xf32>
    %28 = vector.multi_reduction <add>, %27, %cst_17 [1] : vector<16x128xf32> to vector<16xf32>
    %29 = vector.shape_cast %28 : vector<16xf32> to vector<16x1xf32>
    %30 = tpu.reciprocal %29 : vector<16x1xf32> -> vector<16x1xf32>
    %31 = vector.broadcast %30 : vector<16x1xf32> to vector<16x128xf32>
    %32 = arith.mulf %27, %31 : vector<16x128xf32>
    %33 = arith.subf %22, %32 : vector<16x128xf32>
    %34 = vector.broadcast %4 : vector<1x128xf32> to vector<16x128xf32>
    %35 = arith.mulf %34, %33 : vector<16x128xf32>
    %36 = arith.addf %32, %35 : vector<16x128xf32>
    %cst_18 = arith.constant dense<0xFF800000> : vector<16xf32>
    %37 = vector.multi_reduction <maximumf>, %36, %cst_18 [1] : vector<16x128xf32> to vector<16xf32>
    %38 = vector.shape_cast %37 : vector<16xf32> to vector<16x1xf32>
    %39 = vector.broadcast %38 : vector<16x1xf32> to vector<16x128xf32>
    %40 = arith.subf %36, %39 : vector<16x128xf32>
    %41 = math.exp %40 : vector<16x128xf32>
    %42 = vector.broadcast %6 : vector<1x128xf32> to vector<16x128xf32>
    %43 = arith.mulf %41, %42 : vector<16x128xf32>
    %cst_19 = arith.constant dense<0.000000e+00> : vector<16xf32>
    %44 = vector.multi_reduction <add>, %43, %cst_19 [1] : vector<16x128xf32> to vector<16xf32>
    %45 = vector.shape_cast %44 : vector<16xf32> to vector<16x1xf32>
    %46 = tpu.reciprocal %45 : vector<16x1xf32> -> vector<16x1xf32>
    %47 = vector.broadcast %46 : vector<16x1xf32> to vector<16x128xf32>
    %48 = arith.mulf %43, %47 : vector<16x128xf32>
    %c0_20 = arith.constant 0 : index
    %c0_21 = arith.constant 0 : index
    %49 = vector.load %arg8[%c0_20, %c0_21] : memref<16x128xf32, #tpu.memory_space<vmem>>, vector<16x128xf32>
    tpu.vector_store %arg8[%c0_20, %c0_21], %48 {strides = array<i32>} : memref<16x128xf32, #tpu.memory_space<vmem>>, vector<16x128xf32>,
    return
  }
  func.func @transform_0(%arg0: i32) -> (i32, i32) {
    %c0_i32 = arith.constant 0 : i32
    %c0_i32_0 = arith.constant 0 : i32
    return %arg0, %c0_i32 : i32, i32
  }
  func.func @transform_1(%arg0: i32) -> (i32, i32) {
    %c0_i32 = arith.constant 0 : i32
    %c0_i32_0 = arith.constant 0 : i32
    return %arg0, %c0_i32 : i32, i32
  }
  func.func @transform_2(%arg0: i32) -> (i32, i32) {
    %c0_i32 = arith.constant 0 : i32
    %c0_i32_0 = arith.constant 0 : i32
    %c0_i32_1 = arith.constant 0 : i32
    return %c0_i32, %c0_i32_0 : i32, i32
  }
  func.func @transform_3(%arg0: i32) -> (i32, i32) {
    %c0_i32 = arith.constant 0 : i32
    %c0_i32_0 = arith.constant 0 : i32
    %c0_i32_1 = arith.constant 0 : i32
    return %c0_i32, %c0_i32_0 : i32, i32
  }
  func.func @transform_4(%arg0: i32) -> (i32, i32) {
    %c0_i32 = arith.constant 0 : i32
    %c0_i32_0 = arith.constant 0 : i32
    %c0_i32_1 = arith.constant 0 : i32
    return %c0_i32, %c0_i32_0 : i32, i32
  }
  func.func @transform_5(%arg0: i32) -> (i32, i32) {
    %c0_i32 = arith.constant 0 : i32
    %c0_i32_0 = arith.constant 0 : i32
    %c0_i32_1 = arith.constant 0 : i32
    return %c0_i32, %c0_i32_0 : i32, i32
  }
  func.func @transform_6(%arg0: i32) -> (i32, i32) {
    %c0_i32 = arith.constant 0 : i32
    %c0_i32_0 = arith.constant 0 : i32
    %c0_i32_1 = arith.constant 0 : i32
    return %c0_i32, %c0_i32_0 : i32, i32
  }
  func.func @transform_7(%arg0: i32) -> (i32, i32) {
    %c0_i32 = arith.constant 0 : i32
    %c0_i32_0 = arith.constant 0 : i32
    return %arg0, %c0_i32 : i32, i32
  }
}

</mosaic_0001>

<llo_original>
// kernel: kingbert_ensemble_fused.1
$region0: #{kingbert_ensemble_fused.1}
  #allocation0 [shape = 'u32[]', space=smem, size = 0x4, offset = 0x4, fixed_abs, tag = 'smem constant byte address 0x4 - core index']
  #allocation1 [shape = 'u32[144,128]{1,0:T(1,128)}', space=vmem, size = 0x12000, scoped, tag = 'internal scratch']
  %s0 = inlined_call_operand.vmem [shape: bf16[16,128], index: 0, kind: input, shape index: {}]
  %s1 = inlined_call_operand.vmem [shape: bf16[16,128], index: 1, kind: input, shape index: {}]
  %s2 = inlined_call_operand.vmem [shape: bf16[128,128], index: 2, kind: input, shape index: {}]
  %s3 = inlined_call_operand.vmem [shape: bf16[128,128], index: 3, kind: input, shape index: {}]
  %s4 = inlined_call_operand.vmem [shape: f32[1,128], index: 4, kind: input, shape index: {}]
  %s5 = inlined_call_operand.vmem [shape: f32[1,128], index: 5, kind: input, shape index: {}]
  %s6 = inlined_call_operand.vmem [shape: f32[1,128], index: 6, kind: input, shape index: {}]
  %s7 = inlined_call_operand.vmem [shape: f32[16,128], index: 7, kind: output, shape index: {}]
  %s8 = sld [smem:[#allocation0]]
  $region38: #{kingbert_ensemble_fused.1} parent=0
    _
  %s10 = ssub.s32 1, %s8
  %s11 = scalar_select 0, %s10, %s8
  // Predicated region
  $region2: #{kingbert_ensemble_fused.1} parent=0 // pred_check
    _
  $region3: #{kingbert_ensemble_fused.1} parent=0 // pred_check_branch
    %13 = sbr.rel (0) target = $region5
  $region4: #{kingbert_ensemble_fused.1} parent=0 // pred_region
    _
  $region5: #{kingbert_ensemble_fused.1} parent=0 // pred_fallthru
    _
  // Predicated region
  $region6: #{kingbert_ensemble_fused.1} parent=0 // pred_check
    _
  $region7: #{kingbert_ensemble_fused.1} parent=0 // pred_check_branch
    %15 = sbr.rel (0) target = $region9
  $region8: #{kingbert_ensemble_fused.1} parent=0 // pred_region
    _
  $region9: #{kingbert_ensemble_fused.1} parent=0 // pred_fallthru
    _
  // Predicated region
  $region10: #{kingbert_ensemble_fused.1} parent=0 // pred_check
    _
  $region11: #{kingbert_ensemble_fused.1} parent=0 // pred_check_branch
    %17 = sbr.rel (0) target = $region13
  $region12: #{kingbert_ensemble_fused.1} parent=0 // pred_region
    _
  $region13: #{kingbert_ensemble_fused.1} parent=0 // pred_fallthru
    _
  // Predicated region
  $region14: #{kingbert_ensemble_fused.1} parent=0 // pred_check
    _
  $region15: #{kingbert_ensemble_fused.1} parent=0 // pred_check_branch
    %19 = sbr.rel (0) target = $region17
  $region16: #{kingbert_ensemble_fused.1} parent=0 // pred_region
    _
  $region17: #{kingbert_ensemble_fused.1} parent=0 // pred_fallthru
    _
  // Predicated region
  $region18: #{kingbert_ensemble_fused.1} parent=0 // pred_check
    _
  $region19: #{kingbert_ensemble_fused.1} parent=0 // pred_check_branch
    %21 = sbr.rel (0) target = $region21
  $region20: #{kingbert_ensemble_fused.1} parent=0 // pred_region
    _
  $region21: #{kingbert_ensemble_fused.1} parent=0 // pred_fallthru
    _
  // Predicated region
  $region22: #{kingbert_ensemble_fused.1} parent=0 // pred_check
    _
  $region23: #{kingbert_ensemble_fused.1} parent=0 // pred_check_branch
    %23 = sbr.rel (0) target = $region25
  $region24: #{kingbert_ensemble_fused.1} parent=0 // pred_region
    _
  $region25: #{kingbert_ensemble_fused.1} parent=0 // pred_fallthru
    _
  // Predicated region
  $region26: #{kingbert_ensemble_fused.1} parent=0 // pred_check
    _
  $region27: #{kingbert_ensemble_fused.1} parent=0 // pred_check_branch
    %25 = sbr.rel (0) target = $region29
  $region28: #{kingbert_ensemble_fused.1} parent=0 // pred_region
    _
  $region29: #{kingbert_ensemble_fused.1} parent=0 // pred_fallthru
    _
  %v27 = vld [vmem:[%s0] sm:$0xf]
  %v28 = vld [vmem:[%s0 + $0x4] sm:$0xf]
  %v29 = vld [vmem:[%s1] sm:$0xf]
  %v30 = vld [vmem:[%s1 + $0x4] sm:$0xf]
  %v31 = vld [vmem:[%s2] sm:$0xf]
  %v32 = vld [vmem:[%s2 + $0x4] sm:$0xf]
  %v33 = vld [vmem:[%s2 + $0x8] sm:$0xf]
  %v34 = vld [vmem:[%s2 + $0xc] sm:$0xf]
  %v35 = vld [vmem:[%s2 + $0x10] sm:$0xf]
  %v36 = vld [vmem:[%s2 + $0x14] sm:$0xf]
  %v37 = vld [vmem:[%s2 + $0x18] sm:$0xf]
  %v38 = vld [vmem:[%s2 + $0x1c] sm:$0xf]
  %v39 = vld [vmem:[%s2 + $0x20] sm:$0xf]
  %v40 = vld [vmem:[%s2 + $0x24] sm:$0xf]
  %v41 = vld [vmem:[%s2 + $0x28] sm:$0xf]
  %v42 = vld [vmem:[%s2 + $0x2c] sm:$0xf]
  %v43 = vld [vmem:[%s2 + $0x30] sm:$0xf]
  %v44 = vld [vmem:[%s2 + $0x34] sm:$0xf]
  %v45 = vld [vmem:[%s2 + $0x38] sm:$0xf]
  %v46 = vld [vmem:[%s2 + $0x3c] sm:$0xf]
  %v47 = vld [vmem:[%s3] sm:$0xf]
  %v48 = vld [vmem:[%s3 + $0x4] sm:$0xf]
  %v49 = vld [vmem:[%s3 + $0x8] sm:$0xf]
  %v50 = vld [vmem:[%s3 + $0xc] sm:$0xf]
  %v51 = vld [vmem:[%s3 + $0x10] sm:$0xf]
  %v52 = vld [vmem:[%s3 + $0x14] sm:$0xf]
  %v53 = vld [vmem:[%s3 + $0x18] sm:$0xf]
  %v54 = vld [vmem:[%s3 + $0x1c] sm:$0xf]
  %v55 = vld [vmem:[%s3 + $0x20] sm:$0xf]
  %v56 = vld [vmem:[%s3 + $0x24] sm:$0xf]
  %v57 = vld [vmem:[%s3 + $0x28] sm:$0xf]
  %v58 = vld [vmem:[%s3 + $0x2c] sm:$0xf]
  %v59 = vld [vmem:[%s3 + $0x30] sm:$0xf]
  %v60 = vld [vmem:[%s3 + $0x34] sm:$0xf]
  %v61 = vld [vmem:[%s3 + $0x38] sm:$0xf]
  %v62 = vld [vmem:[%s3 + $0x3c] sm:$0xf]
  %v63 = vld [vmem:[%s4] sm:$0x1]
  %v64 = vld [vmem:[%s5] sm:$0x1]
  %v65 = vld [vmem:[%s6] sm:$0x1]
  %v67 = vlaneseq
  %v68 = vshrl.u32 %v67, 7
  %v69 = vsub.s32 0, %v68
  %v70 = vrot.slane %v64, %v69
  %v74 = vunpack.c.l.b16 %v27
  %v75 = vunpack.c.l.b16 %v28
  %v76 = vpack.c.b16 %v75, %v74
  %v94 = vunpack.c.l.b16 %v31
  %v95 = vunpack.c.l.b16 %v32
  %v96 = vunpack.c.l.b16 %v33
  %v97 = vunpack.c.l.b16 %v34
  %v98 = vunpack.c.l.b16 %v35
  %v99 = vunpack.c.l.b16 %v36
  %v100 = vunpack.c.l.b16 %v37
  %v101 = vunpack.c.l.b16 %v38
  %v102 = vunpack.c.l.b16 %v39
  %v103 = vunpack.c.l.b16 %v40
  %v104 = vunpack.c.l.b16 %v41
  %v105 = vunpack.c.l.b16 %v42
  %v106 = vunpack.c.l.b16 %v43
  %v107 = vunpack.c.l.b16 %v44
  %v108 = vunpack.c.l.b16 %v45
  %v109 = vunpack.c.l.b16 %v46
  %v110 = vpack.c.b16 %v95, %v94
  %v111 = vpack.c.b16 %v97, %v96
  %v112 = vpack.c.b16 %v99, %v98
  %v113 = vpack.c.b16 %v101, %v100
  %v114 = vpack.c.b16 %v103, %v102
  %v115 = vpack.c.b16 %v105, %v104
  %v116 = vpack.c.b16 %v107, %v106
  %v117 = vpack.c.b16 %v109, %v108
  %126 = vmatprep.subr.bf16.mxu0 0
  %127 = vmatpush1.bf16.msra.mxu0 %v110
  %128 = vmatprep.subr.bf16.mxu0 0
  %129 = vmatpush1.bf16.msra.mxu0 %v111
  %130 = vmatprep.subr.bf16.mxu0 0
  %131 = vmatpush1.bf16.msra.mxu0 %v112
  %132 = vmatprep.subr.bf16.mxu0 0
  %133 = vmatpush1.bf16.msra.mxu0 %v113
  %134 = vmatprep.subr.bf16.mxu0 0
  %135 = vmatpush1.bf16.msra.mxu0 %v114
  %136 = vmatprep.subr.bf16.mxu0 0
  %137 = vmatpush1.bf16.msra.mxu0 %v115
  %138 = vmatprep.subr.bf16.mxu0 0
  %139 = vmatpush1.bf16.msra.mxu0 %v116
  %140 = vmatprep.subr.bf16.mxu0 0
  %141 = vmatpush1.bf16.msra.mxu0 %v117
  %142 = vmatprep.subr.bf16.mxu0 0
  %143 = vmatpush1.bf16.msra.mxu0 0
  %144 = vmatprep.subr.bf16.mxu0 0
  %145 = vmatpush1.bf16.msra.mxu0 0
  %146 = vmatprep.subr.bf16.mxu0 0
  %147 = vmatpush1.bf16.msra.mxu0 0
  %148 = vmatprep.subr.bf16.mxu0 0
  %149 = vmatpush1.bf16.msra.mxu0 0
  %150 = vmatprep.subr.bf16.mxu0 0
  %151 = vmatpush1.bf16.msra.mxu0 0
  %152 = vmatprep.subr.bf16.mxu0 0
  %153 = vmatpush1.bf16.msra.mxu0 0
  %154 = vmatprep.subr.bf16.mxu0 0
  %155 = vmatpush1.bf16.msra.mxu0 0
  %156 = vmatprep.subr.bf16.mxu0 0
  %157 = vmatpush1.bf16.msra.mxu0 0
  %158 = vmatprep.mubr.bf16.mxu0 0
  %159 = vmatmul.mubr.bf16.gmra.mrb[0].mxu0 %v76
  %v160 = vpop.f32.mrb[0].mxu0
  %v161 = vadd.f32 %v70, %v160
  %v162 = vpop.f32.mrb[0].mxu0
  %v163 = vpop.f32.mrb[0].mxu0
  %v164 = vadd.f32 %v70, %v163
  %v165 = vpop.f32.mrb[0].mxu0
  %166 = vdwg.mxu0
  %v169 = vunpack.c.l.b16 %v29
  %v170 = vunpack.c.l.b16 %v30
  %v171 = vpack.c.b16 %v170, %v169
  %v189 = vunpack.c.l.b16 %v47
  %v190 = vunpack.c.l.b16 %v48
  %v191 = vunpack.c.l.b16 %v49
  %v192 = vunpack.c.l.b16 %v50
  %v193 = vunpack.c.l.b16 %v51
  %v194 = vunpack.c.l.b16 %v52
  %v195 = vunpack.c.l.b16 %v53
  %v196 = vunpack.c.l.b16 %v54
  %v197 = vunpack.c.l.b16 %v55
  %v198 = vunpack.c.l.b16 %v56
  %v199 = vunpack.c.l.b16 %v57
  %v200 = vunpack.c.l.b16 %v58
  %v201 = vunpack.c.l.b16 %v59
  %v202 = vunpack.c.l.b16 %v60
  %v203 = vunpack.c.l.b16 %v61
  %v204 = vunpack.c.l.b16 %v62
  %v205 = vpack.c.b16 %v190, %v189
  %v206 = vpack.c.b16 %v192, %v191
  %v207 = vpack.c.b16 %v194, %v193
  %v208 = vpack.c.b16 %v196, %v195
  %v209 = vpack.c.b16 %v198, %v197
  %v210 = vpack.c.b16 %v200, %v199
  %v211 = vpack.c.b16 %v202, %v201
  %v212 = vpack.c.b16 %v204, %v203
  %221 = vmatprep.subr.bf16.mxu0 0
  %222 = vmatpush1.bf16.msra.mxu0 %v205
  %223 = vmatprep.subr.bf16.mxu0 0
  %224 = vmatpush1.bf16.msra.mxu0 %v206
  %225 = vmatprep.subr.bf16.mxu0 0
  %226 = vmatpush1.bf16.msra.mxu0 %v207
  %227 = vmatprep.subr.bf16.mxu0 0
  %228 = vmatpush1.bf16.msra.mxu0 %v208
  %229 = vmatprep.subr.bf16.mxu0 0
  %230 = vmatpush1.bf16.msra.mxu0 %v209
  %231 = vmatprep.subr.bf16.mxu0 0
  %232 = vmatpush1.bf16.msra.mxu0 %v210
  %233 = vmatprep.subr.bf16.mxu0 0
  %234 = vmatpush1.bf16.msra.mxu0 %v211
  %235 = vmatprep.subr.bf16.mxu0 0
  %236 = vmatpush1.bf16.msra.mxu0 %v212
  %237 = vmatprep.subr.bf16.mxu0 0
  %238 = vmatpush1.bf16.msra.mxu0 0
  %239 = vmatprep.subr.bf16.mxu0 0
  %240 = vmatpush1.bf16.msra.mxu0 0
  %241 = vmatprep.subr.bf16.mxu0 0
  %242 = vmatpush1.bf16.msra.mxu0 0
  %243 = vmatprep.subr.bf16.mxu0 0
  %244 = vmatpush1.bf16.msra.mxu0 0
  %245 = vmatprep.subr.bf16.mxu0 0
  %246 = vmatpush1.bf16.msra.mxu0 0
  %247 = vmatprep.subr.bf16.mxu0 0
  %248 = vmatpush1.bf16.msra.mxu0 0
  %249 = vmatprep.subr.bf16.mxu0 0
  %250 = vmatpush1.bf16.msra.mxu0 0
  %251 = vmatprep.subr.bf16.mxu0 0
  %252 = vmatpush1.bf16.msra.mxu0 0
  %253 = vmatprep.mubr.bf16.mxu0 0
  %254 = vmatmul.mubr.bf16.gmra.mrb[0].mxu0 %v171
  %v255 = vpop.f32.mrb[0].mxu0
  %v256 = vadd.f32 %v70, %v255
  %v257 = vpop.f32.mrb[0].mxu0
  %v258 = vpop.f32.mrb[0].mxu0
  %v259 = vadd.f32 %v70, %v258
  %v260 = vpop.f32.mrb[0].mxu0
  %261 = vdwg.mxu0
  %262 = vmax.xlane.f32.xlu0 %v161
  %v263 = vpop.xlane.xlu0 %262
  %264 = vmax.xlane.f32.xlu0 %v164
  %v265 = vpop.xlane.xlu0 %264
  %v266 = vsub.f32 %v161, %v263
  %v267 = vsub.f32 %v164, %v265
  %v268 = vmul.f32 %v266, 1.442695
  %v269 = vpow.pop %v268
  %v270 = vmul.f32 %v267, 1.442695
  %v271 = vpow.pop %v270
  %272 = vadd.xlane.f32.xlu0 %v269
  %v273 = vpop.xlane.xlu0 %272
  %274 = vadd.xlane.f32.xlu0 %v271
  %v275 = vpop.xlane.xlu0 %274
  %v276 = vrcp.pop %v273
  %v277 = vrcp.pop %v275
  %v278 = vmul.f32 %v269, %v276
  %v279 = vmul.f32 %v271, %v277
  %280 = vmax.xlane.f32.xlu0 %v256
  %v281 = vpop.xlane.xlu0 %280
  %282 = vmax.xlane.f32.xlu0 %v259
  %v283 = vpop.xlane.xlu0 %282
  %v284 = vsub.f32 %v256, %v281
  %v285 = vsub.f32 %v259, %v283
  %v286 = vmul.f32 %v284, 1.442695
  %v287 = vpow.pop %v286
  %v288 = vmul.f32 %v285, 1.442695
  %v289 = vpow.pop %v288
  %290 = vadd.xlane.f32.xlu0 %v287
  %v291 = vpop.xlane.xlu0 %290
  %292 = vadd.xlane.f32.xlu0 %v289
  %v293 = vpop.xlane.xlu0 %292
  %v294 = vrcp.pop %v291
  %v295 = vrcp.pop %v293
  %v296 = vmul.f32 %v287, %v294
  %v297 = vmul.f32 %v289, %v295
  %v298 = vsub.f32 %v278, %v296
  %v299 = vsub.f32 %v279, %v297
  %v301 = vlaneseq
  %v302 = vshrl.u32 %v301, 7
  %v303 = vsub.s32 0, %v302
  %v304 = vrot.slane %v63, %v303
  %v306 = vmul.f32 %v304, %v298
  %v307 = vmul.f32 %v304, %v299
  %v308 = vadd.f32 %v296, %v306
  %v309 = vadd.f32 %v297, %v307
  %310 = vmax.xlane.f32.xlu0 %v308
  %v311 = vpop.xlane.xlu0 %310
  %312 = vmax.xlane.f32.xlu0 %v309
  %v313 = vpop.xlane.xlu0 %312
  %v314 = vsub.f32 %v308, %v311
  %v315 = vsub.f32 %v309, %v313
  %v316 = vmul.f32 %v314, 1.442695
  %v317 = vpow.pop %v316
  %v318 = vmul.f32 %v315, 1.442695
  %v319 = vpow.pop %v318
  %v321 = vlaneseq
  %v322 = vshrl.u32 %v321, 7
  %v323 = vsub.s32 0, %v322
  %v324 = vrot.slane %v65, %v323
  %v326 = vmul.f32 %v317, %v324
  %v327 = vmul.f32 %v319, %v324
  %328 = vadd.xlane.f32.xlu0 %v326
  %v329 = vpop.xlane.xlu0 %328
  %330 = vadd.xlane.f32.xlu0 %v327
  %v331 = vpop.xlane.xlu0 %330
  %v332 = vrcp.pop %v329
  %v333 = vrcp.pop %v331
  %v334 = vmul.f32 %v326, %v332
  %v335 = vmul.f32 %v327, %v333
  %336 = vst [vmem:[%s7] sm:$0xff] %v334
  %337 = vst [vmem:[%s7 + $0x8] sm:$0xff] %v335
  // Predicated region
  $region30: #{kingbert_ensemble_fused.1} parent=0 // pred_check
    _
  $region31: #{kingbert_ensemble_fused.1} parent=0 // pred_check_branch
    %339 = sbr.rel (0) target = $region33
  $region32: #{kingbert_ensemble_fused.1} parent=0 // pred_region
    _
  $region33: #{kingbert_ensemble_fused.1} parent=0 // pred_fallthru
    _
  // Predicated region
  $region34: #{kingbert_ensemble_fused.1} parent=0 // pred_check
    _
  $region35: #{kingbert_ensemble_fused.1} parent=0 // pred_check_branch
    %341 = sbr.rel (0) target = $region37
  $region36: #{kingbert_ensemble_fused.1} parent=0 // pred_region
    _
  $region37: #{kingbert_ensemble_fused.1} parent=0 // pred_fallthru
    _

</llo_original>
